<compile_context>
chip_gen: v7x
topology: tpu7x:2x2x1
jax: 0.10.0
libtpu: 0.0.40
codegen_flags: <defaults>
</compile_context>

<pallas_src>
import functools

import jax
import jax.numpy as jnp
from jax.experimental import pallas as pl
from jax.experimental.pallas import tpu as pltpu

LANE = 128
SUBLANE = 8


def _round_up(x, m):
    return (x + m - 1) // m * m


def critic_kernel(x_ref, w_ref, b_ref, out_ref, *, hp, op):
    """One batch tile: q = L3(relu(L2(relu(L1(x))))), all dims lane-padded."""
    x = x_ref[...]                                                 # (TB, Kmax) f32

    # layer 1: (TB, Kmax) @ (Kmax, Hp) -> (TB, Hp)
    h = jnp.dot(x.astype(jnp.bfloat16), w_ref[:, 0:hp],
                preferred_element_type=jnp.float32)
    h = jnp.maximum(h + b_ref[0:1, 0:hp], 0.0)

    # layer 2: (TB, Hp) @ (Hp, Hp) -> (TB, Hp)
    h = jnp.dot(h.astype(jnp.bfloat16), w_ref[0:hp, hp:2 * hp],
                preferred_element_type=jnp.float32)
    h = jnp.maximum(h + b_ref[1:2, 0:hp], 0.0)

    # layer 3 (Q head, padded to `op` lanes): (TB, Hp) @ (Hp, Op) -> (TB, Op)
    q = jnp.dot(h.astype(jnp.bfloat16), w_ref[0:hp, 2 * hp:2 * hp + op],
                preferred_element_type=jnp.float32)
    out_ref[...] = (q + b_ref[2:3, 0:op]).astype(out_ref.dtype)


def init_params(key, state_dim, action_dim, hidden_dim):
    """Mimics torch.nn.Linear init; weights stored (in, out), biases (out,)."""
    ks = jax.random.split(key, 6)

    def linear(kw, kb, fan_in, fan_out):
        bound = 1.0 / jnp.sqrt(jnp.float32(fan_in))
        w = jax.random.uniform(kw, (fan_in, fan_out), jnp.float32, -bound, bound)
        b = jax.random.uniform(kb, (fan_out,), jnp.float32, -bound, bound)
        return w, b

    in_dim = state_dim + action_dim
    w1, b1 = linear(ks[0], ks[1], in_dim, hidden_dim)
    w2, b2 = linear(ks[2], ks[3], hidden_dim, hidden_dim)
    w3, b3 = linear(ks[4], ks[5], hidden_dim, 1)
    return (w1, b1, w2, b2, w3, b3)


def pack_params(params, state_dim, action_dim, hidden_dim):
    """Pack (w1,b1,w2,b2,w3,b3) into one lane-dense bf16 weight slab + f32 bias slab."""
    w1, b1, w2, b2, w3, b3 = params
    k0 = state_dim + action_dim
    k0p = _round_up(k0, LANE)
    hp = _round_up(hidden_dim, LANE)
    op = LANE                        # 1-wide Q head padded to a full lane tile
    kmax = max(k0p, hp)

    wslab = jnp.zeros((kmax, 2 * hp + op), jnp.float32)
    wslab = wslab.at[:k0, 0:hidden_dim].set(w1)
    wslab = wslab.at[:hidden_dim, hp:hp + hidden_dim].set(w2)
    wslab = wslab.at[:hidden_dim, 2 * hp:2 * hp + 1].set(w3)
    wslab = wslab.astype(jnp.bfloat16)

    bslab = jnp.zeros((SUBLANE, hp), jnp.float32)
    bslab = bslab.at[0, 0:hidden_dim].set(b1)
    bslab = bslab.at[1, 0:hidden_dim].set(b2)
    bslab = bslab.at[2, 0:1].set(b3)
    return wslab, bslab, hp, op


def critic_forward(state, action, wslab, bslab, hp, op, *, block_batch=512):
    """Q(state, action) via the Pallas kernel. Returns (B, 1) float32."""
    B, s_dim = state.shape
    a_dim = action.shape[1]
    kmax = wslab.shape[0]

    # Batch tile: as large as reasonable (<=512 rows keeps all buffers well
    # under v7x's smaller scoped-VMEM budget), padded to a sublane multiple.
    tb = min(block_batch, _round_up(B, SUBLANE))
    bp = _round_up(B, tb)

    # torch.cat([state, action], 1), zero-padded into a lane-dense slab.
    x = jnp.zeros((bp, kmax), jnp.float32)
    x = x.at[:B, 0:s_dim].set(state)
    x = x.at[:B, s_dim:s_dim + a_dim].set(action)

    grid = (bp // tb,)
    flops = 2 * bp * (kmax * hp + hp * hp + hp * op)
    bytes_accessed = 4 * (x.size + bslab.size + bp * op) + 2 * wslab.size

    kernel = functools.partial(critic_kernel, hp=hp, op=op)
    out = pl.pallas_call(
        kernel,
        out_shape=jax.ShapeDtypeStruct((bp, op), jnp.float32),
        grid_spec=pltpu.PrefetchScalarGridSpec(
            num_scalar_prefetch=0,
            grid=grid,
            in_specs=[
                pl.BlockSpec((tb, kmax), lambda i: (i, 0)),   # batch-tiled input
                pl.BlockSpec(wslab.shape, lambda i: (0, 0)),  # resident weights
                pl.BlockSpec(bslab.shape, lambda i: (0, 0)),  # resident biases
            ],
            out_specs=pl.BlockSpec((tb, op), lambda i: (i, 0)),
        ),
        compiler_params=pltpu.CompilerParams(
            dimension_semantics=("parallel",),
        ),
        cost_estimate=pl.CostEstimate(
            flops=flops, transcendentals=0, bytes_accessed=bytes_accessed),
    )(x, wslab, bslab)

    return out[:B, 0:1]


def critic_forward_ref(state, action, params):
    """Pure-JAX reference mirroring the kernel's bf16-operand / f32-accum matmuls."""
    w1, b1, w2, b2, w3, b3 = params
    x = jnp.concatenate([state, action], axis=1)

    def lin(v, w, b):
        return jnp.dot(v.astype(jnp.bfloat16), w.astype(jnp.bfloat16),
                       preferred_element_type=jnp.float32) + b

    h = jnp.maximum(lin(x, w1, b1), 0.0)
    h = jnp.maximum(lin(h, w2, b2), 0.0)
    return lin(h, w3, b3)


if __name__ == "__main__":
    # Small, self-consistent shapes for a TD3 critic.
    batch, state_dim, action_dim, hidden_dim = 2, 8, 4, 32

    key = jax.random.PRNGKey(0)
    k_state, k_action, k_params = jax.random.split(key, 3)

    state = jax.random.normal(k_state, (batch, state_dim), jnp.float32)
    action = jax.random.normal(k_action, (batch, action_dim), jnp.float32)
    params = init_params(k_params, state_dim, action_dim, hidden_dim)

    wslab, bslab, hp, op = pack_params(params, state_dim, action_dim, hidden_dim)

    q = critic_forward(state, action, wslab, bslab, hp, op)
    q = jax.block_until_ready(q)

    ref = critic_forward_ref(state, action, params)
    assert q.shape == (batch, 1)
    assert jnp.allclose(q, ref, atol=1e-4, rtol=1e-4), (q, ref)

    print("KERNEL_OK")
</pallas_src>

<mosaic_0001>
module attributes {stable_mosaic.version = 11 : i64} {
  func.func @critic_kernel(%arg0: i32, %arg1: memref<8x128xf32, #tpu.memory_space<vmem>>, %arg2: memref<128x384xbf16, #tpu.memory_space<vmem>>, %arg3: memref<8x128xf32, #tpu.memory_space<vmem>>, %arg4: memref<8x128xf32, #tpu.memory_space<vmem>>) attributes {dimension_semantics = [#tpu.dimension_semantics<parallel>], iteration_bounds = array<i64: 1>, scalar_prefetch = 0 : i64, scratch_operands = 0 : i64, tpu.core_type = #tpu.core_type<tc>, window_params = [{transform_indices = @transform_0, window_bounds = array<i64: 8, 128>}, {pipeline_mode = #tpu.pipeline_mode<synchronous>, transform_indices = @transform_1, window_bounds = array<i64: 128, 384>}, {pipeline_mode = #tpu.pipeline_mode<synchronous>, transform_indices = @transform_2, window_bounds = array<i64: 8, 128>}, {transform_indices = @transform_3, window_bounds = array<i64: 8, 128>}]} {
    %c0 = arith.constant 0 : index
    %c0_0 = arith.constant 0 : index
    %0 = vector.load %arg1[%c0, %c0_0] : memref<8x128xf32, #tpu.memory_space<vmem>>, vector<8x128xf32>
    %1 = arith.truncf %0 : vector<8x128xf32> to vector<8x128xbf16>
    %c0_1 = arith.constant 0 : index
    %c0_2 = arith.constant 0 : index
    %2 = vector.load %arg2[%c0_1, %c0_2] : memref<128x384xbf16, #tpu.memory_space<vmem>>, vector<128x128xbf16>
    %cst = arith.constant dense<0.000000e+00> : vector<8x128xf32>
    %3 = tpu.matmul %1, %2, %cst {dimension_numbers = #tpu.dot_dimension_numbers<[1], [0], [0], [1], [0, 0, 1, 1], [], []>} : vector<8x128xbf16>, vector<128x128xbf16>, vector<8x128xf32> -> vector<8x128xf32>
    %c0_3 = arith.constant 0 : index
    %c0_4 = arith.constant 0 : index
    %4 = vector.load %arg3[%c0_3, %c0_4] : memref<8x128xf32, #tpu.memory_space<vmem>>, vector<1x128xf32>
    %5 = vector.broadcast %4 : vector<1x128xf32> to vector<8x128xf32>
    %6 = arith.addf %3, %5 : vector<8x128xf32>
    %cst_5 = arith.constant 0.000000e+00 : f32
    %7 = vector.broadcast %cst_5 : f32 to vector<8x128xf32>
    %8 = arith.maximumf %6, %7 : vector<8x128xf32>
    %9 = arith.truncf %8 : vector<8x128xf32> to vector<8x128xbf16>
    %c0_6 = arith.constant 0 : index
    %c128 = arith.constant 128 : index
    %10 = vector.load %arg2[%c0_6, %c128] : memref<128x384xbf16, #tpu.memory_space<vmem>>, vector<128x128xbf16>
    %cst_7 = arith.constant dense<0.000000e+00> : vector<8x128xf32>
    %11 = tpu.matmul %9, %10, %cst_7 {dimension_numbers = #tpu.dot_dimension_numbers<[1], [0], [0], [1], [0, 0, 1, 1], [], []>} : vector<8x128xbf16>, vector<128x128xbf16>, vector<8x128xf32> -> vector<8x128xf32>
    %c1 = arith.constant 1 : index
    %c0_8 = arith.constant 0 : index
    %12 = vector.load %arg3[%c1, %c0_8] : memref<8x128xf32, #tpu.memory_space<vmem>>, vector<1x128xf32>
    %13 = vector.broadcast %12 : vector<1x128xf32> to vector<8x128xf32>
    %14 = arith.addf %11, %13 : vector<8x128xf32>
    %cst_9 = arith.constant 0.000000e+00 : f32
    %15 = vector.broadcast %cst_9 : f32 to vector<8x128xf32>
    %16 = arith.maximumf %14, %15 : vector<8x128xf32>
    %17 = arith.truncf %16 : vector<8x128xf32> to vector<8x128xbf16>
    %c0_10 = arith.constant 0 : index
    %c256 = arith.constant 256 : index
    %18 = vector.load %arg2[%c0_10, %c256] : memref<128x384xbf16, #tpu.memory_space<vmem>>, vector<128x128xbf16>
    %cst_11 = arith.constant dense<0.000000e+00> : vector<8x128xf32>
    %19 = tpu.matmul %17, %18, %cst_11 {dimension_numbers = #tpu.dot_dimension_numbers<[1], [0], [0], [1], [0, 0, 1, 1], [], []>} : vector<8x128xbf16>, vector<128x128xbf16>, vector<8x128xf32> -> vector<8x128xf32>
    %c2 = arith.constant 2 : index
    %c0_12 = arith.constant 0 : index
    %20 = vector.load %arg3[%c2, %c0_12] : memref<8x128xf32, #tpu.memory_space<vmem>>, vector<1x128xf32>
    %21 = vector.broadcast %20 : vector<1x128xf32> to vector<8x128xf32>
    %22 = arith.addf %19, %21 : vector<8x128xf32>
    %c0_13 = arith.constant 0 : index
    %c0_14 = arith.constant 0 : index
    %23 = vector.load %arg4[%c0_13, %c0_14] : memref<8x128xf32, #tpu.memory_space<vmem>>, vector<8x128xf32>
    tpu.vector_store %arg4[%c0_13, %c0_14], %22 {strides = array<i32>} : memref<8x128xf32, #tpu.memory_space<vmem>>, vector<8x128xf32>,
    return
  }
  func.func @transform_0(%arg0: i32) -> (i32, i32) {
    %c0_i32 = arith.constant 0 : i32
    %c0_i32_0 = arith.constant 0 : i32
    return %arg0, %c0_i32 : i32, i32
  }
  func.func @transform_1(%arg0: i32) -> (i32, i32) {
    %c0_i32 = arith.constant 0 : i32
    %c0_i32_0 = arith.constant 0 : i32
    %c0_i32_1 = arith.constant 0 : i32
    return %c0_i32, %c0_i32_0 : i32, i32
  }
  func.func @transform_2(%arg0: i32) -> (i32, i32) {
    %c0_i32 = arith.constant 0 : i32
    %c0_i32_0 = arith.constant 0 : i32
    %c0_i32_1 = arith.constant 0 : i32
    return %c0_i32, %c0_i32_0 : i32, i32
  }
  func.func @transform_3(%arg0: i32) -> (i32, i32) {
    %c0_i32 = arith.constant 0 : i32
    %c0_i32_0 = arith.constant 0 : i32
    return %arg0, %c0_i32 : i32, i32
  }
}

</mosaic_0001>

<llo_original>
// kernel: tpu_custom_call.1
$region0: #{tpu_custom_call.1}
  #allocation0 [shape = 'u32[]', space=smem, size = 0x4, offset = 0x4, fixed_abs, tag = 'smem constant byte address 0x4 - core index']
  #allocation1 [shape = 'u32[144,128]{1,0:T(1,128)}', space=vmem, size = 0x12000, scoped, tag = 'internal scratch']
  %s0 = inlined_call_operand.hbm [shape: f32[8,128], index: 0, kind: input, shape index: {}]
  %s1 = inlined_call_operand.hbm [shape: bf16[128,384], index: 1, kind: input, shape index: {}]
  %s2 = inlined_call_operand.hbm [shape: f32[8,128], index: 2, kind: input, shape index: {}]
  %s3 = inlined_call_operand.hbm [shape: f32[8,128], index: 3, kind: output, shape index: {}]
  %s4 = sld [smem:[#allocation0]]
  $region34: #{tpu_custom_call.1} parent=0
    _
  %s6 = ssub.s32 1, %s4
  %s7 = scalar_select 0, %s6, %s4
  $region1: #{tpu_custom_call.1} parent=0
    #allocation2 [shape = 'u8[4096]{0}', space=vmem, size = 0x1000, scoped, tag = 'input window, operand 0, single buffered']
    #allocation3 [shape = 's32[1]{0}', space=sflag, size = 0x4, scoped, tag = 'scoped memory for tpu_custom_call.1']
    #allocation4 [shape = 's32[1]{0}', space=sflag, size = 0x4, scoped, tag = 'scoped memory for tpu_custom_call.1']
    #allocation5 [shape = 'u8[98304]{0}', space=vmem, size = 0x18000, scoped, tag = 'input window, operand 1, single buffered']
    #allocation6 [shape = 's32[1]{0}', space=sflag, size = 0x4, scoped, tag = 'scoped memory for tpu_custom_call.1']
    #allocation7 [shape = 'u8[4096]{0}', space=vmem, size = 0x1000, scoped, tag = 'input window, operand 2, single buffered']
    #allocation8 [shape = 'u8[4096]{0}', space=vmem, size = 0x1000, scoped, tag = 'output window, operand 0, single buffered']
    %8 = vsyncpa [#allocation3], 0
    %9 = vsyncpa [#allocation6], 0
    %10 = vsyncpa [#allocation4], 0
    // Predicated region
    $region2: #{tpu_custom_call.1} parent=1 // pred_check
      _
    $region3: #{tpu_custom_call.1} parent=1 // pred_check_branch
      %12 = sbr.rel (0) target = $region5
    $region4: #{tpu_custom_call.1} parent=1 // pred_region
      %s14 = ssub.s32 128, 128
      %15 = vsyncadd [#allocation3], %s14
      %s17 = sshll.u32 [#allocation2], 4
      %s18 = int_to_ptr.vmem [resolvable:$true] %s17
      %20 = dma.hbm_to_vmem [thread:$0]  %s0, 128, %s18, [#allocation3]
    $region5: #{tpu_custom_call.1} parent=1 // pred_fallthru
      _
    // Predicated region
    $region6: #{tpu_custom_call.1} parent=1 // pred_check
      _
    $region7: #{tpu_custom_call.1} parent=1 // pred_check_branch
      %22 = sbr.rel (0) target = $region9
    $region8: #{tpu_custom_call.1} parent=1 // pred_region
      %s24 = ssub.s32 3072, 3072
      %25 = vsyncadd [#allocation6], %s24
      %s26 = sshll.u32 [#allocation5], 4
      %s27 = int_to_ptr.vmem [resolvable:$true] %s26
      %32 = dma.hbm_to_vmem [thread:$0]  %s1, 3072, %s27, [#allocation6], 192, 192, 12
    $region9: #{tpu_custom_call.1} parent=1 // pred_fallthru
      _
    // Predicated region
    $region10: #{tpu_custom_call.1} parent=1 // pred_check
      _
    $region11: #{tpu_custom_call.1} parent=1 // pred_check_branch
      %34 = sbr.rel (0) target = $region13
    $region12: #{tpu_custom_call.1} parent=1 // pred_region
      %s36 = ssub.s32 128, 128
      %37 = vsyncadd [#allocation6], %s36
      %s39 = sshll.u32 [#allocation7], 4
      %s40 = int_to_ptr.vmem [resolvable:$true] %s39
      %42 = dma.hbm_to_vmem [thread:$0]  %s2, 128, %s40, [#allocation6]
    $region13: #{tpu_custom_call.1} parent=1 // pred_fallthru
      _
    // Predicated region
    $region14: #{tpu_custom_call.1} parent=1 // pred_check
      _
    $region15: #{tpu_custom_call.1} parent=1 // pred_check_branch
      %44 = sbr.rel (0) target = $region17
    $region16: #{tpu_custom_call.1} parent=1 // pred_region
      %45 = dma.done [#allocation3], 128
    $region17: #{tpu_custom_call.1} parent=1 // pred_fallthru
      _
    // Predicated region
    $region18: #{tpu_custom_call.1} parent=1 // pred_check
      _
    $region19: #{tpu_custom_call.1} parent=1 // pred_check_branch
      %47 = sbr.rel (0) target = $region21
    $region20: #{tpu_custom_call.1} parent=1 // pred_region
      %48 = dma.done [#allocation6], 3072
    $region21: #{tpu_custom_call.1} parent=1 // pred_fallthru
      _
    // Predicated region
    $region22: #{tpu_custom_call.1} parent=1 // pred_check
      _
    $region23: #{tpu_custom_call.1} parent=1 // pred_check_branch
      %50 = sbr.rel (0) target = $region25
    $region24: #{tpu_custom_call.1} parent=1 // pred_region
      %51 = dma.done [#allocation6], 128
    $region25: #{tpu_custom_call.1} parent=1 // pred_fallthru
      _
    %v53 = vld [vmem:[#allocation2] sm:$0xff]
    %v54 = vpack.c.bf16 %v53, %v53
    %v55 = vld [vmem:[#allocation5] sm:$0xf]
    %v56 = vld [vmem:[#allocation5 + $0xc] sm:$0xf]
    %v57 = vld [vmem:[#allocation5 + $0x18] sm:$0xf]
    %v58 = vld [vmem:[#allocation5 + $0x24] sm:$0xf]
    %v59 = vld [vmem:[#allocation5 + $0x30] sm:$0xf]
    %v60 = vld [vmem:[#allocation5 + $0x3c] sm:$0xf]
    %v61 = vld [vmem:[#allocation5 + $0x48] sm:$0xf]
    %v62 = vld [vmem:[#allocation5 + $0x54] sm:$0xf]
    %v63 = vld [vmem:[#allocation5 + $0x60] sm:$0xf]
    %v64 = vld [vmem:[#allocation5 + $0x6c] sm:$0xf]
    %v65 = vld [vmem:[#allocation5 + $0x78] sm:$0xf]
    %v66 = vld [vmem:[#allocation5 + $0x84] sm:$0xf]
    %v67 = vld [vmem:[#allocation5 + $0x90] sm:$0xf]
    %v68 = vld [vmem:[#allocation5 + $0x9c] sm:$0xf]
    %v69 = vld [vmem:[#allocation5 + $0xa8] sm:$0xf]
    %v70 = vld [vmem:[#allocation5 + $0xb4] sm:$0xf]
    %v71 = vld [vmem:[#allocation7] sm:$0x1]
    %v72 = vlaneseq
    %v73 = vshrl.u32 %v72, 7
    %v74 = vsub.s32 0, %v73
    %v75 = vrot.slane %v71, %v74
    %v92 = vunpack.c.l.b16 %v55
    %v93 = vunpack.c.l.b16 %v56
    %v94 = vunpack.c.l.b16 %v57
    %v95 = vunpack.c.l.b16 %v58
    %v96 = vunpack.c.l.b16 %v59
    %v97 = vunpack.c.l.b16 %v60
    %v98 = vunpack.c.l.b16 %v61
    %v99 = vunpack.c.l.b16 %v62
    %v100 = vunpack.c.l.b16 %v63
    %v101 = vunpack.c.l.b16 %v64
    %v102 = vunpack.c.l.b16 %v65
    %v103 = vunpack.c.l.b16 %v66
    %v104 = vunpack.c.l.b16 %v67
    %v105 = vunpack.c.l.b16 %v68
    %v106 = vunpack.c.l.b16 %v69
    %v107 = vunpack.c.l.b16 %v70
    %v108 = vpack.c.b16 %v93, %v92
    %v109 = vpack.c.b16 %v95, %v94
    %v110 = vpack.c.b16 %v97, %v96
    %v111 = vpack.c.b16 %v99, %v98
    %v112 = vpack.c.b16 %v101, %v100
    %v113 = vpack.c.b16 %v103, %v102
    %v114 = vpack.c.b16 %v105, %v104
    %v115 = vpack.c.b16 %v107, %v106
    %124 = vmatprep.subr.bf16.mxu0 0
    %125 = vmatpush1.bf16.msra.mxu0 %v108
    %126 = vmatprep.subr.bf16.mxu0 0
    %127 = vmatpush1.bf16.msra.mxu0 %v109
    %128 = vmatprep.subr.bf16.mxu0 0
    %129 = vmatpush1.bf16.msra.mxu0 %v110
    %130 = vmatprep.subr.bf16.mxu0 0
    %131 = vmatpush1.bf16.msra.mxu0 %v111
    %132 = vmatprep.subr.bf16.mxu0 0
    %133 = vmatpush1.bf16.msra.mxu0 %v112
    %134 = vmatprep.subr.bf16.mxu0 0
    %135 = vmatpush1.bf16.msra.mxu0 %v113
    %136 = vmatprep.subr.bf16.mxu0 0
    %137 = vmatpush1.bf16.msra.mxu0 %v114
    %138 = vmatprep.subr.bf16.mxu0 0
    %139 = vmatpush1.bf16.msra.mxu0 %v115
    %140 = vmatprep.subr.bf16.mxu0 0
    %141 = vmatpush1.bf16.msra.mxu0 0
    %142 = vmatprep.subr.bf16.mxu0 0
    %143 = vmatpush1.bf16.msra.mxu0 0
    %144 = vmatprep.subr.bf16.mxu0 0
    %145 = vmatpush1.bf16.msra.mxu0 0
    %146 = vmatprep.subr.bf16.mxu0 0
    %147 = vmatpush1.bf16.msra.mxu0 0
    %148 = vmatprep.subr.bf16.mxu0 0
    %149 = vmatpush1.bf16.msra.mxu0 0
    %150 = vmatprep.subr.bf16.mxu0 0
    %151 = vmatpush1.bf16.msra.mxu0 0
    %152 = vmatprep.subr.bf16.mxu0 0
    %153 = vmatpush1.bf16.msra.mxu0 0
    %154 = vmatprep.subr.bf16.mxu0 0
    %155 = vmatpush1.bf16.msra.mxu0 0
    %156 = vmatprep.mubr.bf16.mxu0 0
    %157 = vmatmul.mubr.bf16.gmra.mrb[0].mxu0 %v54
    %v158 = vpop.f32.mrb[0].mxu0
    %v159 = vadd.f32 %v75, %v158
    %v160 = vpop.f32.mrb[0].mxu0
    %v161 = vpop.f32.mrb[0].mxu0
    %v162 = vpop.f32.mrb[0].mxu0
    %163 = vdwg.mxu0
    %v164 = vmax.f32 %v159, 0.0
    %v165 = vpack.c.bf16 %v164, %v164
    %v166 = vld [vmem:[#allocation5 + $0x4] sm:$0xf]
    %v167 = vld [vmem:[#allocation5 + $0x10] sm:$0xf]
    %v168 = vld [vmem:[#allocation5 + $0x1c] sm:$0xf]
    %v169 = vld [vmem:[#allocation5 + $0x28] sm:$0xf]
    %v170 = vld [vmem:[#allocation5 + $0x34] sm:$0xf]
    %v171 = vld [vmem:[#allocation5 + $0x40] sm:$0xf]
    %v172 = vld [vmem:[#allocation5 + $0x4c] sm:$0xf]
    %v173 = vld [vmem:[#allocation5 + $0x58] sm:$0xf]
    %v174 = vld [vmem:[#allocation5 + $0x64] sm:$0xf]
    %v175 = vld [vmem:[#allocation5 + $0x70] sm:$0xf]
    %v176 = vld [vmem:[#allocation5 + $0x7c] sm:$0xf]
    %v177 = vld [vmem:[#allocation5 + $0x88] sm:$0xf]
    %v178 = vld [vmem:[#allocation5 + $0x94] sm:$0xf]
    %v179 = vld [vmem:[#allocation5 + $0xa0] sm:$0xf]
    %v180 = vld [vmem:[#allocation5 + $0xac] sm:$0xf]
    %v181 = vld [vmem:[#allocation5 + $0xb8] sm:$0xf]
    %v182 = vld [vmem:[#allocation7 + $0x1] sm:$0x1]
    %v183 = vlaneseq
    %v184 = vshrl.u32 %v183, 7
    %v185 = vsub.s32 0, %v184
    %v186 = vrot.slane %v182, %v185
    %v203 = vunpack.c.l.b16 %v166
    %v204 = vunpack.c.l.b16 %v167
    %v205 = vunpack.c.l.b16 %v168
    %v206 = vunpack.c.l.b16 %v169
    %v207 = vunpack.c.l.b16 %v170
    %v208 = vunpack.c.l.b16 %v171
    %v209 = vunpack.c.l.b16 %v172
    %v210 = vunpack.c.l.b16 %v173
    %v211 = vunpack.c.l.b16 %v174
    %v212 = vunpack.c.l.b16 %v175
    %v213 = vunpack.c.l.b16 %v176
    %v214 = vunpack.c.l.b16 %v177
    %v215 = vunpack.c.l.b16 %v178
    %v216 = vunpack.c.l.b16 %v179
    %v217 = vunpack.c.l.b16 %v180
    %v218 = vunpack.c.l.b16 %v181
    %v219 = vpack.c.b16 %v204, %v203
    %v220 = vpack.c.b16 %v206, %v205
    %v221 = vpack.c.b16 %v208, %v207
    %v222 = vpack.c.b16 %v210, %v209
    %v223 = vpack.c.b16 %v212, %v211
    %v224 = vpack.c.b16 %v214, %v213
    %v225 = vpack.c.b16 %v216, %v215
    %v226 = vpack.c.b16 %v218, %v217
    %235 = vmatprep.subr.bf16.mxu0 0
    %236 = vmatpush1.bf16.msra.mxu0 %v219
    %237 = vmatprep.subr.bf16.mxu0 0
    %238 = vmatpush1.bf16.msra.mxu0 %v220
    %239 = vmatprep.subr.bf16.mxu0 0
    %240 = vmatpush1.bf16.msra.mxu0 %v221
    %241 = vmatprep.subr.bf16.mxu0 0
    %242 = vmatpush1.bf16.msra.mxu0 %v222
    %243 = vmatprep.subr.bf16.mxu0 0
    %244 = vmatpush1.bf16.msra.mxu0 %v223
    %245 = vmatprep.subr.bf16.mxu0 0
    %246 = vmatpush1.bf16.msra.mxu0 %v224
    %247 = vmatprep.subr.bf16.mxu0 0
    %248 = vmatpush1.bf16.msra.mxu0 %v225
    %249 = vmatprep.subr.bf16.mxu0 0
    %250 = vmatpush1.bf16.msra.mxu0 %v226
    %251 = vmatprep.subr.bf16.mxu0 0
    %252 = vmatpush1.bf16.msra.mxu0 0
    %253 = vmatprep.subr.bf16.mxu0 0
    %254 = vmatpush1.bf16.msra.mxu0 0
    %255 = vmatprep.subr.bf16.mxu0 0
    %256 = vmatpush1.bf16.msra.mxu0 0
    %257 = vmatprep.subr.bf16.mxu0 0
    %258 = vmatpush1.bf16.msra.mxu0 0
    %259 = vmatprep.subr.bf16.mxu0 0
    %260 = vmatpush1.bf16.msra.mxu0 0
    %261 = vmatprep.subr.bf16.mxu0 0
    %262 = vmatpush1.bf16.msra.mxu0 0
    %263 = vmatprep.subr.bf16.mxu0 0
    %264 = vmatpush1.bf16.msra.mxu0 0
    %265 = vmatprep.subr.bf16.mxu0 0
    %266 = vmatpush1.bf16.msra.mxu0 0
    %267 = vmatprep.mubr.bf16.mxu0 0
    %268 = vmatmul.mubr.bf16.gmra.mrb[0].mxu0 %v165
    %v269 = vpop.f32.mrb[0].mxu0
    %v270 = vadd.f32 %v186, %v269
    %v271 = vpop.f32.mrb[0].mxu0
    %v272 = vpop.f32.mrb[0].mxu0
    %v273 = vpop.f32.mrb[0].mxu0
    %274 = vdwg.mxu0
    %v275 = vmax.f32 %v270, 0.0
    %v276 = vpack.c.bf16 %v275, %v275
    %v277 = vld [vmem:[#allocation5 + $0x8] sm:$0xf]
    %v278 = vld [vmem:[#allocation5 + $0x14] sm:$0xf]
    %v279 = vld [vmem:[#allocation5 + $0x20] sm:$0xf]
    %v280 = vld [vmem:[#allocation5 + $0x2c] sm:$0xf]
    %v281 = vld [vmem:[#allocation5 + $0x38] sm:$0xf]
    %v282 = vld [vmem:[#allocation5 + $0x44] sm:$0xf]
    %v283 = vld [vmem:[#allocation5 + $0x50] sm:$0xf]
    %v284 = vld [vmem:[#allocation5 + $0x5c] sm:$0xf]
    %v285 = vld [vmem:[#allocation5 + $0x68] sm:$0xf]
    %v286 = vld [vmem:[#allocation5 + $0x74] sm:$0xf]
    %v287 = vld [vmem:[#allocation5 + $0x80] sm:$0xf]
    %v288 = vld [vmem:[#allocation5 + $0x8c] sm:$0xf]
    %v289 = vld [vmem:[#allocation5 + $0x98] sm:$0xf]
    %v290 = vld [vmem:[#allocation5 + $0xa4] sm:$0xf]
    %v291 = vld [vmem:[#allocation5 + $0xb0] sm:$0xf]
    %v292 = vld [vmem:[#allocation5 + $0xbc] sm:$0xf]
    %v293 = vld [vmem:[#allocation7 + $0x2] sm:$0x1]
    %v294 = vlaneseq
    %v295 = vshrl.u32 %v294, 7
    %v296 = vsub.s32 0, %v295
    %v297 = vrot.slane %v293, %v296
    %v314 = vunpack.c.l.b16 %v277
    %v315 = vunpack.c.l.b16 %v278
    %v316 = vunpack.c.l.b16 %v279
    %v317 = vunpack.c.l.b16 %v280
    %v318 = vunpack.c.l.b16 %v281
    %v319 = vunpack.c.l.b16 %v282
    %v320 = vunpack.c.l.b16 %v283
    %v321 = vunpack.c.l.b16 %v284
    %v322 = vunpack.c.l.b16 %v285
    %v323 = vunpack.c.l.b16 %v286
    %v324 = vunpack.c.l.b16 %v287
    %v325 = vunpack.c.l.b16 %v288
    %v326 = vunpack.c.l.b16 %v289
    %v327 = vunpack.c.l.b16 %v290
    %v328 = vunpack.c.l.b16 %v291
    %v329 = vunpack.c.l.b16 %v292
    %v330 = vpack.c.b16 %v315, %v314
    %v331 = vpack.c.b16 %v317, %v316
    %v332 = vpack.c.b16 %v319, %v318
    %v333 = vpack.c.b16 %v321, %v320
    %v334 = vpack.c.b16 %v323, %v322
    %v335 = vpack.c.b16 %v325, %v324
    %v336 = vpack.c.b16 %v327, %v326
    %v337 = vpack.c.b16 %v329, %v328
    %346 = vmatprep.subr.bf16.mxu0 0
    %347 = vmatpush1.bf16.msra.mxu0 %v330
    %348 = vmatprep.subr.bf16.mxu0 0
    %349 = vmatpush1.bf16.msra.mxu0 %v331
    %350 = vmatprep.subr.bf16.mxu0 0
    %351 = vmatpush1.bf16.msra.mxu0 %v332
    %352 = vmatprep.subr.bf16.mxu0 0
    %353 = vmatpush1.bf16.msra.mxu0 %v333
    %354 = vmatprep.subr.bf16.mxu0 0
    %355 = vmatpush1.bf16.msra.mxu0 %v334
    %356 = vmatprep.subr.bf16.mxu0 0
    %357 = vmatpush1.bf16.msra.mxu0 %v335
    %358 = vmatprep.subr.bf16.mxu0 0
    %359 = vmatpush1.bf16.msra.mxu0 %v336
    %360 = vmatprep.subr.bf16.mxu0 0
    %361 = vmatpush1.bf16.msra.mxu0 %v337
    %362 = vmatprep.subr.bf16.mxu0 0
    %363 = vmatpush1.bf16.msra.mxu0 0
    %364 = vmatprep.subr.bf16.mxu0 0
    %365 = vmatpush1.bf16.msra.mxu0 0
    %366 = vmatprep.subr.bf16.mxu0 0
    %367 = vmatpush1.bf16.msra.mxu0 0
    %368 = vmatprep.subr.bf16.mxu0 0
    %369 = vmatpush1.bf16.msra.mxu0 0
    %370 = vmatprep.subr.bf16.mxu0 0
    %371 = vmatpush1.bf16.msra.mxu0 0
    %372 = vmatprep.subr.bf16.mxu0 0
    %373 = vmatpush1.bf16.msra.mxu0 0
    %374 = vmatprep.subr.bf16.mxu0 0
    %375 = vmatpush1.bf16.msra.mxu0 0
    %376 = vmatprep.subr.bf16.mxu0 0
    %377 = vmatpush1.bf16.msra.mxu0 0
    %378 = vmatprep.mubr.bf16.mxu0 0
    %379 = vmatmul.mubr.bf16.gmra.mrb[0].mxu0 %v276
    %v380 = vpop.f32.mrb[0].mxu0
    %v381 = vadd.f32 %v297, %v380
    %v382 = vpop.f32.mrb[0].mxu0
    %v383 = vpop.f32.mrb[0].mxu0
    %v384 = vpop.f32.mrb[0].mxu0
    %385 = vdwg.mxu0
    %386 = vst [vmem:[#allocation8] sm:$0xff] %v381
    // Predicated region
    $region26: #{tpu_custom_call.1} parent=1 // pred_check
      _
    $region27: #{tpu_custom_call.1} parent=1 // pred_check_branch
      %388 = sbr.rel (0) target = $region29
    $region28: #{tpu_custom_call.1} parent=1 // pred_region
      %s390 = ssub.s32 128, 128
      %391 = vsyncadd [#allocation4], %s390
      %s393 = sshll.u32 [#allocation8], 4
      %s394 = int_to_ptr.vmem [resolvable:$true] %s393
      %396 = dma.vmem_to_hbm [thread:$0]  %s394, 128, %s3, [#allocation4]
    $region29: #{tpu_custom_call.1} parent=1 // pred_fallthru
      _
    // Predicated region
    $region30: #{tpu_custom_call.1} parent=1 // pred_check
      _
    $region31: #{tpu_custom_call.1} parent=1 // pred_check_branch
      %398 = sbr.rel (0) target = $region33
    $region32: #{tpu_custom_call.1} parent=1 // pred_region
      %399 = dma.done [#allocation4], 128
    $region33: #{tpu_custom_call.1} parent=1 // pred_fallthru
      _
    %400 = vsyncpa [#allocation3], 1
    %401 = vsyncpa [#allocation6], 1
    %402 = vsyncpa [#allocation4], 1

</llo_original>
